<compile_context>
chip_gen: v6e
topology: v6e:2x2x1
jax: 0.10.0
libtpu: 0.0.40
codegen_flags: <defaults>
</compile_context>

<pallas_src>
import math
import functools

import jax
import jax.numpy as jnp
from jax import lax
from jax.experimental import pallas as pl
from jax.experimental.pallas import tpu as pltpu


def _attn_kernel(*refs, scale, masked, with_weights):
    """One grid step: (bt, tq) queries x full-K keys/values for bt batches."""
    if masked:
        vl_ref, q_ref, k_ref, v_ref = refs[:4]
        outs = refs[4:]
    else:
        q_ref, k_ref, v_ref = refs[:3]
        outs = refs[3:]
        vl_ref = None
    o_ref = outs[0]
    w_ref = outs[1] if with_weights else None

    # Fold the 1/sqrt(D) scale into the smaller (bt, tq, D) tile.
    q = q_ref[...] * scale          # (bt, tq, D)
    k = k_ref[...]                  # (bt, K, D)
    v = v_ref[...]                  # (bt, K, Dv)

    # scores = Q @ K^T, expressed as a batched contraction over D
    # (no explicit transpose of K), f32 accumulation on the MXU.
    scores = jnp.einsum("bqd,bkd->bqk", q, k,
                        preferred_element_type=jnp.float32)   # (bt, tq, K) f32

    if masked:
        vlen = vl_ref[...]                                      # (bt, tq, 1) int32
        col = lax.broadcasted_iota(jnp.int32, scores.shape, 2)  # (bt, tq, K)
        scores = jnp.where(col < vlen, scores, jnp.float32(-1e6))

    # Numerically stable softmax along K.
    m = jnp.max(scores, axis=-1, keepdims=True)
    p = jnp.exp(scores - m)
    denom = jnp.sum(p, axis=-1, keepdims=True)
    weights = p * pl.reciprocal(denom, approx=True)  # EUP vrcp (free slot)

    if with_weights:
        w_ref[...] = weights.astype(w_ref.dtype)

    # out = weights @ V  (dropout identity in eval mode)
    o_ref[...] = jnp.einsum("bqk,bkv->bqv", weights.astype(v.dtype), v,
                            preferred_element_type=jnp.float32
                            ).astype(o_ref.dtype)


def _choose_tiles(B, Q, K, D, Dv, itemsize, with_weights,
                  budget_bytes=12 * 1024 * 1024):
    """Pick (batch tile bt, query tile tq) so double-buffered tiles fit the
    default scoped VMEM on all generations (16 MiB v5e / 32 MiB v6e-v7x)."""

    def step_bytes(bt, tq):
        io = bt * (tq * D + K * D + K * Dv + tq * Dv
                   + (tq * K if with_weights else 0)) * itemsize
        scratch = bt * tq * K * 4 + bt * tq * Dv * 4  # f32 intermediates
        return 2 * io + scratch                       # 2x: double buffering

    # Q-tile candidates: full Q (no (8,128) constraint), else sublane-friendly
    # divisors (multiples of 8 to satisfy the (8, 128) block rule).
    tq_cands = [Q] + [t for t in (1024, 512, 256, 128, 64, 32, 16, 8)
                      if t < Q and Q % t == 0]
    bt_cands = [b for b in range(B, 0, -1) if B % b == 0]

    best = None
    for bt in bt_cands:
        for tq in tq_cands:
            if step_bytes(bt, tq) <= budget_bytes:
                if best is None or bt * tq > best[0] * best[1]:
                    best = (bt, tq)
                break
    return best if best is not None else (1, tq_cands[-1])


def dot_product_attention(queries, keys, values, valid_lens=None, *,
                          return_weights=True):
    """Pallas TPU implementation of DotProductAttention.forward (eval mode).

    queries: (B, Q, D), keys: (B, K, D), values: (B, K, Dv)
    valid_lens: None, (B,) or (B, Q) int
    Returns (output (B, Q, Dv), attention_weights (B, Q, K) or None).
    """
    B, Q, D = queries.shape
    _, K, _ = keys.shape
    Dv = values.shape[-1]

    masked = valid_lens is not None
    if masked:
        vl = jnp.asarray(valid_lens, dtype=jnp.int32)
        if vl.ndim == 1:
            vl = jnp.broadcast_to(vl[:, None], (B, Q))
        elif vl.ndim != 2:
            raise ValueError("valid_lens must be None, (B,) or (B, Q)")
        vl = vl.reshape(B, Q, 1)

    scale = 1.0 / math.sqrt(D)
    bt, tq = _choose_tiles(B, Q, K, D, Dv, queries.dtype.itemsize,
                           return_weights)
    grid = (B // bt, Q // tq)

    in_specs = []
    args = []
    if masked:
        in_specs.append(pl.BlockSpec((bt, tq, 1), lambda bi, qi: (bi, qi, 0)))
        args.append(vl)
    in_specs += [
        pl.BlockSpec((bt, tq, D), lambda bi, qi: (bi, qi, 0)),
        # K / V block index independent of the q-tile axis -> stays resident.
        pl.BlockSpec((bt, K, D), lambda bi, qi: (bi, 0, 0)),
        pl.BlockSpec((bt, K, Dv), lambda bi, qi: (bi, 0, 0)),
    ]
    args += [queries, keys, values]

    out_spec_o = pl.BlockSpec((bt, tq, Dv), lambda bi, qi: (bi, qi, 0))
    if return_weights:
        out_shape = (
            jax.ShapeDtypeStruct((B, Q, Dv), queries.dtype),
            jax.ShapeDtypeStruct((B, Q, K), queries.dtype),
        )
        out_specs = (
            out_spec_o,
            pl.BlockSpec((bt, tq, K), lambda bi, qi: (bi, qi, 0)),
        )
    else:
        out_shape = jax.ShapeDtypeStruct((B, Q, Dv), queries.dtype)
        out_specs = out_spec_o

    kernel = functools.partial(_attn_kernel, scale=scale, masked=masked,
                               with_weights=return_weights)

    result = pl.pallas_call(
        kernel,
        out_shape=out_shape,
        grid=grid,
        in_specs=in_specs,
        out_specs=out_specs,
        compiler_params=pltpu.CompilerParams(
            dimension_semantics=("parallel", "parallel")),
    )(*args)

    if return_weights:
        out, weights = result
        return out, weights
    return result, None


def _reference(queries, keys, values, valid_lens):
    d = queries.shape[-1]
    scores = jnp.einsum("bqd,bkd->bqk", queries, keys) / math.sqrt(d)
    if valid_lens is not None:
        vl = jnp.asarray(valid_lens)
        if vl.ndim == 1:
            vl = vl[:, None]
        col = jnp.arange(scores.shape[-1])[None, None, :]
        scores = jnp.where(col < vl[:, :, None], scores, -1e6)
    w = jax.nn.softmax(scores, axis=-1)
    return jnp.einsum("bqk,bkv->bqv", w, values), w


if __name__ == "__main__":
    key = jax.random.PRNGKey(0)
    kq, kk, kv = jax.random.split(key, 3)

    B, Q, K, D, Dv = 2, 8, 8, 32, 32
    queries = jax.random.normal(kq, (B, Q, D), dtype=jnp.float32)
    keys = jax.random.normal(kk, (B, K, D), dtype=jnp.float32)
    values = jax.random.normal(kv, (B, K, Dv), dtype=jnp.float32)

    # Tolerance accounts for the approximate (EUP) reciprocal in the softmax.
    TOL = dict(atol=2e-3, rtol=2e-3)

    # Per-batch (B,) valid lengths.
    valid_lens = jnp.array([3, 6], dtype=jnp.int32)
    out, attn_w = dot_product_attention(queries, keys, values, valid_lens)
    jax.block_until_ready(out)
    jax.block_until_ready(attn_w)
    ref_out, ref_w = _reference(queries, keys, values, valid_lens)
    assert jnp.allclose(out, ref_out, **TOL), "output mismatch (1-D lens)"
    assert jnp.allclose(attn_w, ref_w, **TOL), "weights mismatch (1-D lens)"

    # Per-query (B, Q) valid lengths.
    vl2 = jnp.tile(jnp.arange(1, Q + 1, dtype=jnp.int32)[None, :], (B, 1))
    out2, w2 = dot_product_attention(queries, keys, values, vl2)
    jax.block_until_ready(out2)
    ref_out2, ref_w2 = _reference(queries, keys, values, vl2)
    assert jnp.allclose(out2, ref_out2, **TOL), "output mismatch (2-D lens)"
    assert jnp.allclose(w2, ref_w2, **TOL), "weights mismatch (2-D lens)"

    # No mask, output-only path (skips the O(Q*K) weights writeback).
    out3, w3 = dot_product_attention(queries, keys, values, None,
                                     return_weights=False)
    jax.block_until_ready(out3)
    ref_out3, _ = _reference(queries, keys, values, None)
    assert jnp.allclose(out3, ref_out3, **TOL), "output mismatch (no mask)"
    assert w3 is None

    print("KERNEL_OK")
</pallas_src>

<mosaic_0001>
module attributes {stable_mosaic.version = 11 : i64} {
  func.func @_attn_kernel(%arg0: i32, %arg1: i32, %arg2: memref<2x8x1xi32, #tpu.memory_space<vmem>>, %arg3: memref<2x8x32xf32, #tpu.memory_space<vmem>>, %arg4: memref<2x8x32xf32, #tpu.memory_space<vmem>>, %arg5: memref<2x8x32xf32, #tpu.memory_space<vmem>>, %arg6: memref<2x8x32xf32, #tpu.memory_space<vmem>>, %arg7: memref<2x8x8xf32, #tpu.memory_space<vmem>>) attributes {dimension_semantics = [#tpu.dimension_semantics<parallel>, #tpu.dimension_semantics<parallel>], iteration_bounds = array<i64: 1, 1>, scalar_prefetch = 0 : i64, scratch_operands = 0 : i64, tpu.core_type = #tpu.core_type<tc>, window_params = [{transform_indices = @transform_0, window_bounds = array<i64: 2, 8, 1>}, {transform_indices = @transform_1, window_bounds = array<i64: 2, 8, 32>}, {transform_indices = @transform_2, window_bounds = array<i64: 2, 8, 32>}, {transform_indices = @transform_3, window_bounds = array<i64: 2, 8, 32>}, {transform_indices = @transform_4, window_bounds = array<i64: 2, 8, 32>}, {transform_indices = @transform_5, window_bounds = array<i64: 2, 8, 8>}]} {
    %c0 = arith.constant 0 : index
    %c0_0 = arith.constant 0 : index
    %c0_1 = arith.constant 0 : index
    %0 = vector.load %arg3[%c0, %c0_0, %c0_1] : memref<2x8x32xf32, #tpu.memory_space<vmem>>, vector<2x8x32xf32>
    %cst = arith.constant 0.176776692 : f32
    %1 = vector.broadcast %cst : f32 to vector<2x8x32xf32>
    %2 = arith.mulf %0, %1 : vector<2x8x32xf32>
    %c0_2 = arith.constant 0 : index
    %c0_3 = arith.constant 0 : index
    %c0_4 = arith.constant 0 : index
    %3 = vector.load %arg4[%c0_2, %c0_3, %c0_4] : memref<2x8x32xf32, #tpu.memory_space<vmem>>, vector<2x8x32xf32>
    %c0_5 = arith.constant 0 : index
    %c0_6 = arith.constant 0 : index
    %c0_7 = arith.constant 0 : index
    %4 = vector.load %arg5[%c0_5, %c0_6, %c0_7] : memref<2x8x32xf32, #tpu.memory_space<vmem>>, vector<2x8x32xf32>
    "tpu.trace_start"() <{level = 10 : i32, message = "bqd,bkd->bqk"}> : () -> ()
    %cst_8 = arith.constant dense<0.000000e+00> : vector<2x8x8xf32>
    %5 = tpu.matmul %2, %3, %cst_8 {dimension_numbers = #tpu.dot_dimension_numbers<[2], [2], [1], [1], [0, 0, 0, 1, 1, 1], [0], [0]>} : vector<2x8x32xf32>, vector<2x8x32xf32>, vector<2x8x8xf32> -> vector<2x8x8xf32>
    "tpu.trace_stop"() : () -> ()
    %c0_9 = arith.constant 0 : index
    %c0_10 = arith.constant 0 : index
    %c0_11 = arith.constant 0 : index
    %6 = vector.load %arg2[%c0_9, %c0_10, %c0_11] : memref<2x8x1xi32, #tpu.memory_space<vmem>>, vector<2x8x1xi32>
    %7 = tpu.iota {dimensions = array<i32: 2>} : vector<2x8x8xi32>
    %8 = vector.broadcast %6 : vector<2x8x1xi32> to vector<2x8x8xi32>
    %9 = arith.cmpi slt, %7, %8 : vector<2x8x8xi32>
    %cst_12 = arith.constant -1.000000e+06 : f32
    %10 = vector.broadcast %cst_12 : f32 to vector<2x8x8xf32>
    %11 = arith.select %9, %5, %10 : vector<2x8x8xi1>, vector<2x8x8xf32>
    %cst_13 = arith.constant dense<0xFF800000> : vector<2x8xf32>
    %12 = vector.multi_reduction <maximumf>, %11, %cst_13 [2] : vector<2x8x8xf32> to vector<2x8xf32>
    %13 = vector.shape_cast %12 : vector<2x8xf32> to vector<2x8x1xf32>
    %14 = vector.broadcast %13 : vector<2x8x1xf32> to vector<2x8x8xf32>
    %15 = arith.subf %11, %14 : vector<2x8x8xf32>
    %16 = math.exp %15 : vector<2x8x8xf32>
    %cst_14 = arith.constant dense<0.000000e+00> : vector<2x8xf32>
    %17 = vector.multi_reduction <add>, %16, %cst_14 [2] : vector<2x8x8xf32> to vector<2x8xf32>
    %18 = vector.shape_cast %17 : vector<2x8xf32> to vector<2x8x1xf32>
    %19 = tpu.reciprocal %18 {approx = true} : vector<2x8x1xf32> -> vector<2x8x1xf32>
    %20 = vector.broadcast %19 : vector<2x8x1xf32> to vector<2x8x8xf32>
    %21 = arith.mulf %16, %20 : vector<2x8x8xf32>
    %c0_15 = arith.constant 0 : index
    %c0_16 = arith.constant 0 : index
    %c0_17 = arith.constant 0 : index
    %22 = vector.load %arg7[%c0_15, %c0_16, %c0_17] : memref<2x8x8xf32, #tpu.memory_space<vmem>>, vector<2x8x8xf32>
    tpu.vector_store %arg7[%c0_15, %c0_16, %c0_17], %21 {strides = array<i32>} : memref<2x8x8xf32, #tpu.memory_space<vmem>>, vector<2x8x8xf32>,
    "tpu.trace_start"() <{level = 10 : i32, message = "bqk,bkv->bqv"}> : () -> ()
    %cst_18 = arith.constant dense<0.000000e+00> : vector<2x8x32xf32>
    %23 = tpu.matmul %21, %4, %cst_18 {dimension_numbers = #tpu.dot_dimension_numbers<[2], [1], [1], [2], [0, 0, 0, 1, 1, 2], [0], [0]>} : vector<2x8x8xf32>, vector<2x8x32xf32>, vector<2x8x32xf32> -> vector<2x8x32xf32>
    "tpu.trace_stop"() : () -> ()
    %c0_19 = arith.constant 0 : index
    %c0_20 = arith.constant 0 : index
    %c0_21 = arith.constant 0 : index
    %24 = vector.load %arg6[%c0_19, %c0_20, %c0_21] : memref<2x8x32xf32, #tpu.memory_space<vmem>>, vector<2x8x32xf32>
    tpu.vector_store %arg6[%c0_19, %c0_20, %c0_21], %23 {strides = array<i32>} : memref<2x8x32xf32, #tpu.memory_space<vmem>>, vector<2x8x32xf32>,
    return
  }
  func.func @transform_0(%arg0: i32, %arg1: i32) -> (i32, i32, i32) {
    %c0_i32 = arith.constant 0 : i32
    %c0_i32_0 = arith.constant 0 : i32
    return %arg0, %arg1, %c0_i32 : i32, i32, i32
  }
  func.func @transform_1(%arg0: i32, %arg1: i32) -> (i32, i32, i32) {
    %c0_i32 = arith.constant 0 : i32
    %c0_i32_0 = arith.constant 0 : i32
    return %arg0, %arg1, %c0_i32 : i32, i32, i32
  }
  func.func @transform_2(%arg0: i32, %arg1: i32) -> (i32, i32, i32) {
    %c0_i32 = arith.constant 0 : i32
    %c0_i32_0 = arith.constant 0 : i32
    %c0_i32_1 = arith.constant 0 : i32
    return %arg0, %c0_i32, %c0_i32_0 : i32, i32, i32
  }
  func.func @transform_3(%arg0: i32, %arg1: i32) -> (i32, i32, i32) {
    %c0_i32 = arith.constant 0 : i32
    %c0_i32_0 = arith.constant 0 : i32
    %c0_i32_1 = arith.constant 0 : i32
    return %arg0, %c0_i32, %c0_i32_0 : i32, i32, i32
  }
  func.func @transform_4(%arg0: i32, %arg1: i32) -> (i32, i32, i32) {
    %c0_i32 = arith.constant 0 : i32
    %c0_i32_0 = arith.constant 0 : i32
    return %arg0, %arg1, %c0_i32 : i32, i32, i32
  }
  func.func @transform_5(%arg0: i32, %arg1: i32) -> (i32, i32, i32) {
    %c0_i32 = arith.constant 0 : i32
    %c0_i32_0 = arith.constant 0 : i32
    return %arg0, %arg1, %c0_i32 : i32, i32, i32
  }
}

</mosaic_0001>

<llo_original>
// kernel: tpu_custom_call.1
$region0: #{tpu_custom_call.1}
  #allocation0 [shape = 'u32[]', space=smem, size = 0x4, offset = 0x4, fixed_abs, tag = 'smem constant byte address 0x4 - core index']
  #allocation1 [shape = 'u32[144,128]{1,0:T(1,128)}', space=vmem, size = 0x12000, scoped, tag = 'internal scratch']
  %s0 = inlined_call_operand.vmem [shape: s32[2,8,1], index: 0, kind: input, shape index: {}]
  %s1 = inlined_call_operand.vmem [shape: f32[2,8,32], index: 1, kind: input, shape index: {}]
  %s2 = inlined_call_operand.hbm [shape: f32[2,8,32], index: 2, kind: input, shape index: {}]
  %s3 = inlined_call_operand.hbm [shape: f32[2,8,32], index: 3, kind: input, shape index: {}]
  %s4 = inlined_call_operand.hbm [shape: f32[2,8,32], index: 4, kind: output, shape index: {0}]
  %s5 = inlined_call_operand.hbm [shape: f32[2,8,8], index: 5, kind: output, shape index: {1}]
  %6 = xla_tuple %s4, %s5
  %s7 = sld [smem:[#allocation0]]
  $region42: #{tpu_custom_call.1} parent=0
    _
  %s9 = ssub.s32 1, %s7
  %s10 = scalar_select 0, %s9, %s7
  $region1: #{tpu_custom_call.1} parent=0
    #allocation2 [shape = 'u8[8192]{0}', space=vmem, size = 0x2000, scoped, tag = 'input window, operand 2, single buffered']
    #allocation3 [shape = 's32[1]{0}', space=sflag, size = 0x4, scoped, tag = 'scoped memory for tpu_custom_call.1']
    #allocation4 [shape = 's32[1]{0}', space=sflag, size = 0x4, scoped, tag = 'scoped memory for tpu_custom_call.1']
    #allocation5 [shape = 'u8[8192]{0}', space=vmem, size = 0x2000, scoped, tag = 'input window, operand 3, single buffered']
    #allocation6 [shape = 's32[1]{0}', space=sflag, size = 0x4, scoped, tag = 'scoped memory for tpu_custom_call.1']
    #allocation7 [shape = 'u8[8192]{0}', space=vmem, size = 0x2000, scoped, tag = 'output window, operand 0, single buffered']
    #allocation8 [shape = 'u8[8192]{0}', space=vmem, size = 0x2000, scoped, tag = 'output window, operand 1, single buffered']
    #allocation9 [shape = 's32[1]{0}', space=sflag, size = 0x4, scoped, tag = 'scoped memory for tpu_custom_call.1']
    %11 = vsyncpa [#allocation3], 0
    %12 = vsyncpa [#allocation6], 0
    %13 = vsyncpa [#allocation4], 0
    %14 = vsyncpa [#allocation9], 0
    // Predicated region
    $region2: #{tpu_custom_call.1} parent=1 // pred_check
      _
    $region3: #{tpu_custom_call.1} parent=1 // pred_check_branch
      %16 = sbr.rel (0) target = $region5
    $region4: #{tpu_custom_call.1} parent=1 // pred_region
      _
    $region5: #{tpu_custom_call.1} parent=1 // pred_fallthru
      _
    // Predicated region
    $region6: #{tpu_custom_call.1} parent=1 // pred_check
      _
    $region7: #{tpu_custom_call.1} parent=1 // pred_check_branch
      %18 = sbr.rel (0) target = $region9
    $region8: #{tpu_custom_call.1} parent=1 // pred_region
      _
    $region9: #{tpu_custom_call.1} parent=1 // pred_fallthru
      _
    // Predicated region
    $region10: #{tpu_custom_call.1} parent=1 // pred_check
      _
    $region11: #{tpu_custom_call.1} parent=1 // pred_check_branch
      %20 = sbr.rel (0) target = $region13
    $region12: #{tpu_custom_call.1} parent=1 // pred_region
      %s22 = ssub.s32 256, 256
      %23 = vsyncadd [#allocation3], %s22
      %s24 = sshll.u32 [#allocation2], 4
      %s25 = int_to_ptr.vmem [resolvable:$true] %s24
      %30 = dma.hbm_to_vmem [thread:$0]  %s2, 256, %s25, [#allocation3], 128, 128, 8
    $region13: #{tpu_custom_call.1} parent=1 // pred_fallthru
      _
    // Predicated region
    $region14: #{tpu_custom_call.1} parent=1 // pred_check
      _
    $region15: #{tpu_custom_call.1} parent=1 // pred_check_branch
      %32 = sbr.rel (0) target = $region17
    $region16: #{tpu_custom_call.1} parent=1 // pred_region
      %s34 = ssub.s32 256, 256
      %35 = vsyncadd [#allocation6], %s34
      %s36 = sshll.u32 [#allocation5], 4
      %s37 = int_to_ptr.vmem [resolvable:$true] %s36
      %42 = dma.hbm_to_vmem [thread:$0]  %s3, 256, %s37, [#allocation6], 128, 128, 8
    $region17: #{tpu_custom_call.1} parent=1 // pred_fallthru
      _
    // Predicated region
    $region18: #{tpu_custom_call.1} parent=1 // pred_check
      _
    $region19: #{tpu_custom_call.1} parent=1 // pred_check_branch
      %44 = sbr.rel (0) target = $region21
    $region20: #{tpu_custom_call.1} parent=1 // pred_region
      %45 = dma.done [#allocation3], 256
    $region21: #{tpu_custom_call.1} parent=1 // pred_fallthru
      _
    // Predicated region
    $region22: #{tpu_custom_call.1} parent=1 // pred_check
      _
    $region23: #{tpu_custom_call.1} parent=1 // pred_check_branch
      %47 = sbr.rel (0) target = $region25
    $region24: #{tpu_custom_call.1} parent=1 // pred_region
      %48 = dma.done [#allocation6], 256
    $region25: #{tpu_custom_call.1} parent=1 // pred_fallthru
      _
    %v49 = vld [vmem:[%s1] sm:$0xff]
    %v50 = vld [vmem:[%s1 + $0x8] sm:$0xff]
    %v51 = vmul.f32 %v49, 0.17677669
    %v52 = vmul.f32 %v50, 0.17677669
    %v53 = vld [vmem:[#allocation2] sm:$0xff]
    %v54 = vld [vmem:[#allocation2 + $0x8] sm:$0xff]
    %v55 = vld [vmem:[#allocation5] sm:$0xff]
    %v56 = vld [vmem:[#allocation5 + $0x8] sm:$0xff]
    %vm57 = vcmask 261120
    %v59 = vsel %vm57, %v51, 0
    %v62 = vsel %vm57, %v53, 0
    %64 = vmatprep.subr.mxu0 0.0
    %65 = vmatpush1.xpose.msra.mxu0 0.0
    %66 = vmatprep.subr.mxu0 0.0
    %67 = vmatpush1.xpose.msra.mxu0 0.0
    %68 = vmatprep.subr.mxu0 0.0
    %69 = vmatpush1.xpose.msra.mxu0 0.0
    %70 = vmatprep.subr.mxu0 0.0
    %71 = vmatpush1.xpose.msra.mxu0 0.0
    %72 = vmatprep.subr.mxu0 0.0
    %73 = vmatpush1.xpose.msra.mxu0 0.0
    %74 = vmatprep.subr.mxu0 0.0
    %75 = vmatpush1.xpose.msra.mxu0 0.0
    %76 = vmatprep.subr.mxu0 0.0
    %77 = vmatpush1.xpose.msra.mxu0 0.0
    %78 = vmatprep.subr.mxu0 0.0
    %79 = vmatpush1.xpose.msra.mxu0 0.0
    %80 = vmatprep.subr.mxu0 0.0
    %81 = vmatpush1.xpose.msra.mxu0 0.0
    %82 = vmatprep.subr.mxu0 0.0
    %83 = vmatpush1.xpose.msra.mxu0 0.0
    %84 = vmatprep.subr.mxu0 0.0
    %85 = vmatpush1.xpose.msra.mxu0 0.0
    %86 = vmatprep.subr.mxu0 0.0
    %87 = vmatpush1.xpose.msra.mxu0 0.0
    %88 = vmatprep.subr.mxu0 0.0
    %89 = vmatpush1.xpose.msra.mxu0 0.0
    %90 = vmatprep.subr.mxu0 0.0
    %91 = vmatpush1.xpose.msra.mxu0 0.0
    %92 = vmatprep.subr.mxu0 0.0
    %93 = vmatpush1.xpose.msra.mxu0 0.0
    %94 = vmatprep.subr.mxu0 0.0
    %95 = vmatpush1.xpose.msra.mxu0 %v62
    %96 = vmatprep.subr.mxu0 0.0
    %97 = vmatpush2.xpose.msra.mxu0 0.0
    %98 = vmatprep.subr.mxu0 0.0
    %99 = vmatpush2.xpose.msra.mxu0 0.0
    %100 = vmatprep.subr.mxu0 0.0
    %101 = vmatpush2.xpose.msra.mxu0 0.0
    %102 = vmatprep.subr.mxu0 0.0
    %103 = vmatpush2.xpose.msra.mxu0 0.0
    %104 = vmatprep.subr.mxu0 0.0
    %105 = vmatpush2.xpose.msra.mxu0 0.0
    %106 = vmatprep.subr.mxu0 0.0
    %107 = vmatpush2.xpose.msra.mxu0 0.0
    %108 = vmatprep.subr.mxu0 0.0
    %109 = vmatpush2.xpose.msra.mxu0 0.0
    %110 = vmatprep.subr.mxu0 0.0
    %111 = vmatpush2.xpose.msra.mxu0 0.0
    %112 = vmatprep.subr.mxu0 0.0
    %113 = vmatpush2.xpose.msra.mxu0 0.0
    %114 = vmatprep.subr.mxu0 0.0
    %115 = vmatpush2.xpose.msra.mxu0 0.0
    %116 = vmatprep.subr.mxu0 0.0
    %117 = vmatpush2.xpose.msra.mxu0 0.0
    %118 = vmatprep.subr.mxu0 0.0
    %119 = vmatpush2.xpose.msra.mxu0 0.0
    %120 = vmatprep.subr.mxu0 0.0
    %121 = vmatpush2.xpose.msra.mxu0 0.0
    %122 = vmatprep.subr.mxu0 0.0
    %123 = vmatpush2.xpose.msra.mxu0 0.0
    %124 = vmatprep.subr.mxu0 0.0
    %125 = vmatpush2.xpose.msra.mxu0 0.0
    %126 = vmatprep.subr.mxu0 0.0
    %127 = vmatpush2.xpose.msra.mxu0 0.0
    %128 = vmatprep.mubr.f32.mxu0 0.0
    %129 = vmatmul.mubr.f32.gmra.mxu0 %v59
    %v130 = vpop.f32.mrf.mxu0
    %v131 = vadd.f32 0.0, %v130
    %v132 = vpop.f32.mrf.mxu0
    %133 = vdwg.mxu0
    %v135 = vsel %vm57, %v52, 0
    %v138 = vsel %vm57, %v54, 0
    %140 = vmatprep.subr.mxu0 0.0
    %141 = vmatpush1.xpose.msra.mxu0 0.0
    %142 = vmatprep.subr.mxu0 0.0
    %143 = vmatpush1.xpose.msra.mxu0 0.0
    %144 = vmatprep.subr.mxu0 0.0
    %145 = vmatpush1.xpose.msra.mxu0 0.0
    %146 = vmatprep.subr.mxu0 0.0
    %147 = vmatpush1.xpose.msra.mxu0 0.0
    %148 = vmatprep.subr.mxu0 0.0
    %149 = vmatpush1.xpose.msra.mxu0 0.0
    %150 = vmatprep.subr.mxu0 0.0
    %151 = vmatpush1.xpose.msra.mxu0 0.0
    %152 = vmatprep.subr.mxu0 0.0
    %153 = vmatpush1.xpose.msra.mxu0 0.0
    %154 = vmatprep.subr.mxu0 0.0
    %155 = vmatpush1.xpose.msra.mxu0 0.0
    %156 = vmatprep.subr.mxu0 0.0
    %157 = vmatpush1.xpose.msra.mxu0 0.0
    %158 = vmatprep.subr.mxu0 0.0
    %159 = vmatpush1.xpose.msra.mxu0 0.0
    %160 = vmatprep.subr.mxu0 0.0
    %161 = vmatpush1.xpose.msra.mxu0 0.0
    %162 = vmatprep.subr.mxu0 0.0
    %163 = vmatpush1.xpose.msra.mxu0 0.0
    %164 = vmatprep.subr.mxu0 0.0
    %165 = vmatpush1.xpose.msra.mxu0 0.0
    %166 = vmatprep.subr.mxu0 0.0
    %167 = vmatpush1.xpose.msra.mxu0 0.0
    %168 = vmatprep.subr.mxu0 0.0
    %169 = vmatpush1.xpose.msra.mxu0 0.0
    %170 = vmatprep.subr.mxu0 0.0
    %171 = vmatpush1.xpose.msra.mxu0 %v138
    %172 = vmatprep.subr.mxu0 0.0
    %173 = vmatpush2.xpose.msra.mxu0 0.0
    %174 = vmatprep.subr.mxu0 0.0
    %175 = vmatpush2.xpose.msra.mxu0 0.0
    %176 = vmatprep.subr.mxu0 0.0
    %177 = vmatpush2.xpose.msra.mxu0 0.0
    %178 = vmatprep.subr.mxu0 0.0
    %179 = vmatpush2.xpose.msra.mxu0 0.0
    %180 = vmatprep.subr.mxu0 0.0
    %181 = vmatpush2.xpose.msra.mxu0 0.0
    %182 = vmatprep.subr.mxu0 0.0
    %183 = vmatpush2.xpose.msra.mxu0 0.0
    %184 = vmatprep.subr.mxu0 0.0
    %185 = vmatpush2.xpose.msra.mxu0 0.0
    %186 = vmatprep.subr.mxu0 0.0
    %187 = vmatpush2.xpose.msra.mxu0 0.0
    %188 = vmatprep.subr.mxu0 0.0
    %189 = vmatpush2.xpose.msra.mxu0 0.0
    %190 = vmatprep.subr.mxu0 0.0
    %191 = vmatpush2.xpose.msra.mxu0 0.0
    %192 = vmatprep.subr.mxu0 0.0
    %193 = vmatpush2.xpose.msra.mxu0 0.0
    %194 = vmatprep.subr.mxu0 0.0
    %195 = vmatpush2.xpose.msra.mxu0 0.0
    %196 = vmatprep.subr.mxu0 0.0
    %197 = vmatpush2.xpose.msra.mxu0 0.0
    %198 = vmatprep.subr.mxu0 0.0
    %199 = vmatpush2.xpose.msra.mxu0 0.0
    %200 = vmatprep.subr.mxu0 0.0
    %201 = vmatpush2.xpose.msra.mxu0 0.0
    %202 = vmatprep.subr.mxu0 0.0
    %203 = vmatpush2.xpose.msra.mxu0 0.0
    %204 = vmatprep.mubr.f32.mxu0 0.0
    %205 = vmatmul.mubr.f32.gmra.mxu0 %v135
    %v206 = vpop.f32.mrf.mxu0
    %v207 = vadd.f32 0.0, %v206
    %v208 = vpop.f32.mrf.mxu0
    %209 = vdwg.mxu0
    %v210 = vld [vmem:[%s0] sm:$0xff]
    %v211 = vld [vmem:[%s0 + $0x8] sm:$0xff]
    %v212 = vlaneseq
    %v213 = vand.u32 %v212, 127
    %214 = vset.pattern.permute.xlu0 0
    %215 = vperm.xlu0 %214, %v210
    %v216 = vpop.permute.xlu0 %215
    %217 = vset.pattern.permute.xlu0 0
    %218 = vperm.xlu0 %217, %v211
    %v219 = vpop.permute.xlu0 %218
    %vm220 = vcmp.lt.s32.totalorder %v213, %v216
    %vm221 = vcmp.lt.s32.totalorder %v213, %v219
    %v222 = vsel %vm220, %v131, -1000000.0
    %v223 = vsel %vm221, %v207, -1000000.0
    %vm224 = vcmask 64512
    %v225 = vsel %vm224, %v222, -inf
    %226 = vmax.xlane.f32.xlu0 %v225
    %v227 = vpop.xlane.xlu0 %226
    %v228 = vsel %vm224, %v223, -inf
    %229 = vmax.xlane.f32.xlu0 %v228
    %v230 = vpop.xlane.xlu0 %229
    %v231 = vsub.f32 %v222, %v227
    %v232 = vsub.f32 %v223, %v230
    %v233 = vmul.f32 %v231, 1.442695
    %v234 = vpow.pop %v233
    %v235 = vmul.f32 %v232, 1.442695
    %v236 = vpow.pop %v235
    %v237 = vsel %vm224, %v234, 0.0
    %238 = vadd.xlane.f32.xlu0 %v237
    %v239 = vpop.xlane.xlu0 %238
    %v240 = vsel %vm224, %v236, 0.0
    %241 = vadd.xlane.f32.xlu0 %v240
    %v242 = vpop.xlane.xlu0 %241
    %v243 = vrcp.pop %v239
    %v244 = vrcp.pop %v242
    %v245 = vmul.f32 %v234, %v243
    %v246 = vmul.f32 %v236, %v244
    %247 = vst.msk [vmem:[#allocation8] sm:$0xff] %vm224, %v245
    %248 = vst.msk [vmem:[#allocation8 + $0x8] sm:$0xff] %vm224, %v246
    %v250 = vsel %vm224, %v245, 0
    %252 = vmatprep.subr.mxu0 0.0
    %253 = vmatpush1.msra.mxu0 0.0
    %254 = vmatprep.subr.mxu0 0.0
    %255 = vmatpush1.msra.mxu0 0.0
    %256 = vmatprep.subr.mxu0 0.0
    %257 = vmatpush1.msra.mxu0 0.0
    %258 = vmatprep.subr.mxu0 0.0
    %259 = vmatpush1.msra.mxu0 0.0
    %260 = vmatprep.subr.mxu0 0.0
    %261 = vmatpush1.msra.mxu0 0.0
    %262 = vmatprep.subr.mxu0 0.0
    %263 = vmatpush1.msra.mxu0 0.0
    %264 = vmatprep.subr.mxu0 0.0
    %265 = vmatpush1.msra.mxu0 0.0
    %266 = vmatprep.subr.mxu0 0.0
    %267 = vmatpush1.msra.mxu0 0.0
    %268 = vmatprep.subr.mxu0 0.0
    %269 = vmatpush1.msra.mxu0 0.0
    %270 = vmatprep.subr.mxu0 0.0
    %271 = vmatpush1.msra.mxu0 0.0
    %272 = vmatprep.subr.mxu0 0.0
    %273 = vmatpush1.msra.mxu0 0.0
    %274 = vmatprep.subr.mxu0 0.0
    %275 = vmatpush1.msra.mxu0 0.0
    %276 = vmatprep.subr.mxu0 0.0
    %277 = vmatpush1.msra.mxu0 0.0
    %278 = vmatprep.subr.mxu0 0.0
    %279 = vmatpush1.msra.mxu0 0.0
    %280 = vmatprep.subr.mxu0 0.0
    %281 = vmatpush1.msra.mxu0 0.0
    %282 = vmatprep.subr.mxu0 0.0
    %283 = vmatpush1.msra.mxu0 %v55
    %284 = vmatprep.subr.mxu0 0.0
    %285 = vmatpush2.msra.mxu0 0.0
    %286 = vmatprep.subr.mxu0 0.0
    %287 = vmatpush2.msra.mxu0 0.0
    %288 = vmatprep.subr.mxu0 0.0
    %289 = vmatpush2.msra.mxu0 0.0
    %290 = vmatprep.subr.mxu0 0.0
    %291 = vmatpush2.msra.mxu0 0.0
    %292 = vmatprep.subr.mxu0 0.0
    %293 = vmatpush2.msra.mxu0 0.0
    %294 = vmatprep.subr.mxu0 0.0
    %295 = vmatpush2.msra.mxu0 0.0
    %296 = vmatprep.subr.mxu0 0.0
    %297 = vmatpush2.msra.mxu0 0.0
    %298 = vmatprep.subr.mxu0 0.0
    %299 = vmatpush2.msra.mxu0 0.0
    %300 = vmatprep.subr.mxu0 0.0
    %301 = vmatpush2.msra.mxu0 0.0
    %302 = vmatprep.subr.mxu0 0.0
    %303 = vmatpush2.msra.mxu0 0.0
    %304 = vmatprep.subr.mxu0 0.0
    %305 = vmatpush2.msra.mxu0 0.0
    %306 = vmatprep.subr.mxu0 0.0
    %307 = vmatpush2.msra.mxu0 0.0
    %308 = vmatprep.subr.mxu0 0.0
    %309 = vmatpush2.msra.mxu0 0.0
    %310 = vmatprep.subr.mxu0 0.0
    %311 = vmatpush2.msra.mxu0 0.0
    %312 = vmatprep.subr.mxu0 0.0
    %313 = vmatpush2.msra.mxu0 0.0
    %314 = vmatprep.subr.mxu0 0.0
    %315 = vmatpush2.msra.mxu0 0.0
    %316 = vmatprep.mubr.f32.mxu0 0.0
    %317 = vmatmul.mubr.f32.gmra.mxu0 %v250
    %v318 = vpop.f32.mrf.mxu0
    %v319 = vadd.f32 0.0, %v318
    %v320 = vpop.f32.mrf.mxu0
    %321 = vdwg.mxu0
    %v323 = vsel %vm224, %v246, 0
    %325 = vmatprep.subr.mxu0 0.0
    %326 = vmatpush1.msra.mxu0 0.0
    %327 = vmatprep.subr.mxu0 0.0
    %328 = vmatpush1.msra.mxu0 0.0
    %329 = vmatprep.subr.mxu0 0.0
    %330 = vmatpush1.msra.mxu0 0.0
    %331 = vmatprep.subr.mxu0 0.0
    %332 = vmatpush1.msra.mxu0 0.0
    %333 = vmatprep.subr.mxu0 0.0
    %334 = vmatpush1.msra.mxu0 0.0
    %335 = vmatprep.subr.mxu0 0.0
    %336 = vmatpush1.msra.mxu0 0.0
    %337 = vmatprep.subr.mxu0 0.0
    %338 = vmatpush1.msra.mxu0 0.0
    %339 = vmatprep.subr.mxu0 0.0
    %340 = vmatpush1.msra.mxu0 0.0
    %341 = vmatprep.subr.mxu0 0.0
    %342 = vmatpush1.msra.mxu0 0.0
    %343 = vmatprep.subr.mxu0 0.0
    %344 = vmatpush1.msra.mxu0 0.0
    %345 = vmatprep.subr.mxu0 0.0
    %346 = vmatpush1.msra.mxu0 0.0
    %347 = vmatprep.subr.mxu0 0.0
    %348 = vmatpush1.msra.mxu0 0.0
    %349 = vmatprep.subr.mxu0 0.0
    %350 = vmatpush1.msra.mxu0 0.0
    %351 = vmatprep.subr.mxu0 0.0
    %352 = vmatpush1.msra.mxu0 0.0
    %353 = vmatprep.subr.mxu0 0.0
    %354 = vmatpush1.msra.mxu0 0.0
    %355 = vmatprep.subr.mxu0 0.0
    %356 = vmatpush1.msra.mxu0 %v56
    %357 = vmatprep.subr.mxu0 0.0
    %358 = vmatpush2.msra.mxu0 0.0
    %359 = vmatprep.subr.mxu0 0.0
    %360 = vmatpush2.msra.mxu0 0.0
    %361 = vmatprep.subr.mxu0 0.0
    %362 = vmatpush2.msra.mxu0 0.0
    %363 = vmatprep.subr.mxu0 0.0
    %364 = vmatpush2.msra.mxu0 0.0
    %365 = vmatprep.subr.mxu0 0.0
    %366 = vmatpush2.msra.mxu0 0.0
    %367 = vmatprep.subr.mxu0 0.0
    %368 = vmatpush2.msra.mxu0 0.0
    %369 = vmatprep.subr.mxu0 0.0
    %370 = vmatpush2.msra.mxu0 0.0
    %371 = vmatprep.subr.mxu0 0.0
    %372 = vmatpush2.msra.mxu0 0.0
    %373 = vmatprep.subr.mxu0 0.0
    %374 = vmatpush2.msra.mxu0 0.0
    %375 = vmatprep.subr.mxu0 0.0
    %376 = vmatpush2.msra.mxu0 0.0
    %377 = vmatprep.subr.mxu0 0.0
    %378 = vmatpush2.msra.mxu0 0.0
    %379 = vmatprep.subr.mxu0 0.0
    %380 = vmatpush2.msra.mxu0 0.0
    %381 = vmatprep.subr.mxu0 0.0
    %382 = vmatpush2.msra.mxu0 0.0
    %383 = vmatprep.subr.mxu0 0.0
    %384 = vmatpush2.msra.mxu0 0.0
    %385 = vmatprep.subr.mxu0 0.0
    %386 = vmatpush2.msra.mxu0 0.0
    %387 = vmatprep.subr.mxu0 0.0
    %388 = vmatpush2.msra.mxu0 0.0
    %389 = vmatprep.mubr.f32.mxu0 0.0
    %390 = vmatmul.mubr.f32.gmra.mxu0 %v323
    %v391 = vpop.f32.mrf.mxu0
    %v392 = vadd.f32 0.0, %v391
    %v393 = vpop.f32.mrf.mxu0
    %394 = vdwg.mxu0
    %395 = vst.msk [vmem:[#allocation7] sm:$0xff] %vm57, %v319
    %396 = vst.msk [vmem:[#allocation7 + $0x8] sm:$0xff] %vm57, %v392
    // Predicated region
    $region26: #{tpu_custom_call.1} parent=1 // pred_check
      _
    $region27: #{tpu_custom_call.1} parent=1 // pred_check_branch
      %398 = sbr.rel (0) target = $region29
    $region28: #{tpu_custom_call.1} parent=1 // pred_region
      %s400 = ssub.s32 256, 256
      %401 = vsyncadd [#allocation4], %s400
      %s402 = sshll.u32 [#allocation7], 4
      %s403 = int_to_ptr.vmem [resolvable:$true] %s402
      %408 = dma.vmem_to_hbm [thread:$0]  %s403, 256, %s4, [#allocation4], 128, 128, 8
    $region29: #{tpu_custom_call.1} parent=1 // pred_fallthru
      _
    // Predicated region
    $region30: #{tpu_custom_call.1} parent=1 // pred_check
      _
    $region31: #{tpu_custom_call.1} parent=1 // pred_check_branch
      %410 = sbr.rel (0) target = $region33
    $region32: #{tpu_custom_call.1} parent=1 // pred_region
      %s412 = ssub.s32 256, 256
      %413 = vsyncadd [#allocation9], %s412
      %s414 = sshll.u32 [#allocation8], 4
      %s415 = int_to_ptr.vmem [resolvable:$true] %s414
      %420 = dma.vmem_to_hbm [thread:$0]  %s415, 256, %s5, [#allocation9], 128, 128, 8
    $region33: #{tpu_custom_call.1} parent=1 // pred_fallthru
      _
    // Predicated region
    $region34: #{tpu_custom_call.1} parent=1 // pred_check
      _
    $region35: #{tpu_custom_call.1} parent=1 // pred_check_branch
      %422 = sbr.rel (0) target = $region37
    $region36: #{tpu_custom_call.1} parent=1 // pred_region
      %423 = dma.done [#allocation4], 256
    $region37: #{tpu_custom_call.1} parent=1 // pred_fallthru
      _
    // Predicated region
    $region38: #{tpu_custom_call.1} parent=1 // pred_check
      _
    $region39: #{tpu_custom_call.1} parent=1 // pred_check_branch
      %425 = sbr.rel (0) target = $region41
    $region40: #{tpu_custom_call.1} parent=1 // pred_region
      %426 = dma.done [#allocation9], 256
    $region41: #{tpu_custom_call.1} parent=1 // pred_fallthru
      _
    %427 = vsyncpa [#allocation3], 1
    %428 = vsyncpa [#allocation6], 1
    %429 = vsyncpa [#allocation4], 1
    %430 = vsyncpa [#allocation9], 1

</llo_original>
